<compile_context>
chip_gen: v7x
topology: tpu7x:2x2x1
jax: 0.10.0
libtpu: 0.0.40
codegen_flags: <defaults>
</compile_context>

<pallas_src>
import numpy as np
import jax
import jax.numpy as jnp
from jax.experimental import pallas as pl
from jax.experimental.pallas import tpu as pltpu

IGNORE_INDEX = 255


def _jaccard_sums_kernel(logits_ref, labels_ref, out_ref, *, n_classes):
    """Accumulate per-class [intersection, prob-sum, fg-count] (8,128) partials into out_ref.

    logits_ref: (C, TR, 128) float  (any float dtype; cast to f32 in-kernel)
    labels_ref: (TR, 128) int32
    out_ref   : (3*C, 8, 128) f32 accumulator, resident across the tile grid axis.
    """

    @pl.when(pl.program_id(2) == 0)
    def _():
        out_ref[...] = jnp.zeros_like(out_ref)

    labels = labels_ref[...]                                       # (TR, 128) int32
    valid = (labels != IGNORE_INDEX).astype(jnp.float32)           # (TR, 128)

    # Softmax over the (small) class axis, unrolled as dense lane/sublane planes.
    x = [logits_ref[cc].astype(jnp.float32) for cc in range(n_classes)]   # C x (TR, 128)
    m = x[0]
    for cc in range(1, n_classes):
        m = jnp.maximum(m, x[cc])
    e = [jnp.exp(x[cc] - m) for cc in range(n_classes)]            # EUP
    s = e[0]
    for cc in range(1, n_classes):
        s = s + e[cc]
    inv_s = pl.reciprocal(s, approx=True)                          # EUP slot, not VPU divide
    inv_s = inv_s * (2.0 - s * inv_s)                              # Newton step -> ~exact f32

    def fold(plane):
        """(TR,128) -> (8,128) partial sums using only VPU adds (no XLU reduce)."""
        tr = plane.shape[0]
        acc = plane[0:8, :]
        for r in range(8, tr, 8):
            acc = acc + plane[r:r + 8, :]
        return acc

    for cc in range(n_classes):
        p = e[cc] * inv_s                                          # (TR,128) class-cc prob
        onehot = (labels == cc).astype(jnp.float32)                # ignore/pad (255) -> 0
        out_ref[0 * n_classes + cc] += fold(p * onehot)            # sum(p0 * g0)
        out_ref[1 * n_classes + cc] += fold(p * valid)             # sum_valid(p0)
        out_ref[2 * n_classes + cc] += fold(onehot)                # sum(g0)


def _vmem_plan():
    """(tiling budget bytes, vmem_limit_bytes) chosen per TPU generation."""
    cap = None
    try:
        cap = int(pltpu.get_tpu_info().vmem_capacity_bytes)
    except Exception:
        cap = None
    if cap is None or cap <= 0:
        cap = 64 * 1024 * 1024                      # assume the smallest (v7x) if unknown
    if cap >= 128 * 1024 * 1024:                    # v5e / v6e: 128 MiB physical
        return 40 * 1024 * 1024, 64 * 1024 * 1024
    return 24 * 1024 * 1024, 48 * 1024 * 1024       # v7x: 64 MiB physical


def _default_n_splits(n_items):
    """Split the pixel stream only where a second TensorCore can actually use it (v7x)."""
    kind = ""
    try:
        kind = jax.devices()[0].device_kind.lower()
    except Exception:
        pass
    two_tensorcores = "v7" in kind
    if two_tensorcores and (n_items % 2 == 1):
        return 2
    return 1


def _choose_tile(rows, n_classes, itemsize, n_splits, budget_bytes):
    """Pick tile_r (rows of 128 pixels per grid step) under the VMEM budget."""
    min_r = 8 * max(1, 4 // itemsize)               # 8 (f32), 16 (bf16), 32 (int8) rows
    # bytes resident per row of 128 pixels:
    #   2x double-buffered logits + 2x int32 labels + ~(3C + 4) live f32 (TR,128) temps
    per_row = 128 * (2 * n_classes * itemsize + 2 * 4 + (3 * n_classes + 4) * 4)
    max_r = min(256, (budget_bytes // per_row) // min_r * min_r)   # cap: 32768 pixels/tile
    max_r = max(min_r, max_r)
    rows_per_split = pl.cdiv(rows, n_splits)
    tile_r = min(max_r, pl.cdiv(rows_per_split, min_r) * min_r)
    tiles_per_split = pl.cdiv(rows_per_split, tile_r)
    return int(tile_r), int(tiles_per_split)


def _batched_loss(preds, labels, *, eps=1e-6):
    """preds: (I, C, N) float logits; labels: (I, N) int. Returns (I,) losses."""
    n_items, c, n = preds.shape
    itemsize = jnp.dtype(preds.dtype).itemsize
    n_splits = _default_n_splits(n_items)
    budget, vmem_limit = _vmem_plan()

    rows = pl.cdiv(n, 128)
    tile_r, tiles_per_split = _choose_tile(rows, c, itemsize, n_splits, budget)
    rows_pad = n_splits * tiles_per_split * tile_r
    n_pad = rows_pad * 128

    if n_pad != n:
        preds = jnp.pad(preds, ((0, 0), (0, 0), (0, n_pad - n)))
        labels = jnp.pad(labels, ((0, 0), (0, n_pad - n)), constant_values=IGNORE_INDEX)
    preds4 = preds.reshape(n_items, c, rows_pad, 128)
    labels3 = labels.reshape(n_items, rows_pad, 128).astype(jnp.int32)

    def kernel(logits_ref, labels_ref, out_ref):
        _jaccard_sums_kernel(logits_ref, labels_ref, out_ref, n_classes=c)

    out = pl.pallas_call(
        kernel,
        out_shape=jax.ShapeDtypeStruct((n_items, n_splits, 3 * c, 8, 128), jnp.float32),
        grid_spec=pltpu.PrefetchScalarGridSpec(
            num_scalar_prefetch=0,
            grid=(n_items, n_splits, tiles_per_split),
            in_specs=[
                pl.BlockSpec((None, c, tile_r, 128),
                             lambda b, s, t: (b, 0, s * tiles_per_split + t, 0)),
                pl.BlockSpec((None, tile_r, 128),
                             lambda b, s, t: (b, s * tiles_per_split + t, 0)),
            ],
            out_specs=pl.BlockSpec((None, None, 3 * c, 8, 128),
                                   lambda b, s, t: (b, s, 0, 0, 0)),
        ),
        compiler_params=pltpu.CompilerParams(
            dimension_semantics=("parallel", "parallel", "arbitrary"),
            vmem_limit_bytes=vmem_limit,
        ),
    )(preds4, labels3)

    # Tiny O(C) epilogue in plain JAX: reduce split partials and the (8,128) lane partials.
    sums = jnp.sum(out, axis=(1, 3, 4)).reshape(n_items, 3, c)     # (I, 3, C)
    inter, psum, gsum = sums[:, 0], sums[:, 1], sums[:, 2]
    # tversky with alpha = beta = 1: denom = num + sum(p0*g1) + sum(p1*g0) = psum + gsum - inter
    denom = psum + gsum - inter
    loss_c = 1.0 - inter / (denom + eps)
    present = gsum > 0                                             # classes with fg.sum() != 0
    n_present = jnp.sum(present.astype(jnp.float32), axis=-1)
    total = jnp.sum(jnp.where(present, loss_c, 0.0), axis=-1)
    return jnp.where(n_present > 0, total / jnp.maximum(n_present, 1.0), 0.0)


def soft_jaccord_loss(tmp_list, label_list, ignore_index=255):
    """Pallas-backed SoftJaccordLoss.forward: returns a [len(tmp_list)] loss vector."""
    assert ignore_index == IGNORE_INDEX
    items = []
    for pred, lab in zip(tmp_list, label_list):
        b, c, h, w = pred.shape
        assert b == 1, "label.view(1, 1, H, W) in the reference implies batch size 1"
        items.append((pred.reshape(c, h * w),                       # (C, N) -- no transpose
                      jnp.asarray(lab).reshape(h * w).astype(jnp.int32)))

    same_shape = len({(x.shape, str(x.dtype), y.shape) for x, y in items}) == 1
    if same_shape:
        preds = jnp.stack([x for x, _ in items], axis=0)            # (I, C, N)
        labels = jnp.stack([y for _, y in items], axis=0)           # (I, N)
        return _batched_loss(preds, labels)
    # TODO(synk): heterogeneous item shapes fall back to one launch per item.
    return jnp.concatenate([_batched_loss(x[None], y[None]) for x, y in items], axis=0)


# ---------------------------------------------------------------------------
# pure-numpy reference (mirrors the torch code) for a correctness check
# ---------------------------------------------------------------------------
def _ref_loss_np(pred, label, ignore=255, eps=1e-6):
    pred = np.asarray(pred, dtype=np.float64)
    label = np.asarray(label)
    b, c, h, w = pred.shape
    e = np.exp(pred - pred.max(axis=1, keepdims=True))
    p = e / e.sum(axis=1, keepdims=True)
    probas = np.transpose(p, (0, 2, 3, 1)).reshape(-1, c)
    labels = label.reshape(-1)
    valid = labels != ignore
    vp, vl = probas[valid], labels[valid]
    losses = []
    for cc in range(c):
        fg = (vl == cc).astype(np.float64)
        if fg.sum() == 0:
            continue
        p0 = vp[:, cc]
        num = (p0 * fg).sum()
        den = num + (p0 * (1.0 - fg)).sum() + ((1.0 - p0) * fg).sum()
        losses.append(1.0 - num / (den + eps))
    return float(np.mean(losses)) if losses else 0.0


if __name__ == "__main__":
    key = jax.random.PRNGKey(0)
    B, C, H, W = 1, 4, 16, 16
    n_items = 2

    tmp_list, label_list = [], []
    for i in range(n_items):
        key, k1, k2, k3 = jax.random.split(key, 4)
        pred = jax.random.normal(k1, (B, C, H, W), dtype=jnp.float32)
        lab = jax.random.randint(k2, (H, W), 0, C, dtype=jnp.int32)
        ignore_mask = jax.random.uniform(k3, (H, W)) < 0.1
        lab = jnp.where(ignore_mask, IGNORE_INDEX, lab)
        tmp_list.append(pred)
        label_list.append(lab)

    out = soft_jaccord_loss(tmp_list, label_list, ignore_index=IGNORE_INDEX)
    out = jax.block_until_ready(out)

    ref = np.array([_ref_loss_np(p, l) for p, l in zip(tmp_list, label_list)])
    np.testing.assert_allclose(np.asarray(out), ref, rtol=1e-4, atol=1e-4)

    print("KERNEL_OK")
</pallas_src>

<mosaic_0001>
module attributes {stable_mosaic.version = 11 : i64} {
  func.func @kernel(%arg0: i32, %arg1: i32, %arg2: i32, %arg3: memref<1x4x8x128xf32, #tpu.memory_space<vmem>>, %arg4: memref<1x8x128xi32, #tpu.memory_space<vmem>>, %arg5: memref<1x1x12x8x128xf32, #tpu.memory_space<vmem>>) attributes {dimension_semantics = [#tpu.dimension_semantics<parallel>, #tpu.dimension_semantics<parallel>, #tpu.dimension_semantics<arbitrary>], iteration_bounds = array<i64: 2, 1, 1>, scalar_prefetch = 0 : i64, scratch_operands = 0 : i64, tpu.core_type = #tpu.core_type<tc>, window_params = [{transform_indices = @transform_0, window_bounds = array<i64: 1, 4, 8, 128>}, {transform_indices = @transform_1, window_bounds = array<i64: 1, 8, 128>}, {transform_indices = @transform_2, window_bounds = array<i64: 1, 1, 12, 8, 128>}]} {
    %c0_i32 = arith.constant 0 : i32
    %0 = arith.cmpi eq, %arg2, %c0_i32 : i32
    %1 = arith.extui %0 : i1 to i32
    %c0_i32_0 = arith.constant 0 : i32
    %2 = arith.cmpi ne, %1, %c0_i32_0 : i32
    scf.if %2 {
      %cst_129 = arith.constant 0.000000e+00 : f32
      %136 = vector.broadcast %cst_129 : f32 to vector<12x8x128xf32>
      %c0_130 = arith.constant 0 : index
      %c0_131 = arith.constant 0 : index
      %c0_132 = arith.constant 0 : index
      %c0_133 = arith.constant 0 : index
      %c0_134 = arith.constant 0 : index
      %137 = vector.load %arg5[%c0_130, %c0_131, %c0_132, %c0_133, %c0_134] : memref<1x1x12x8x128xf32, #tpu.memory_space<vmem>>, vector<1x1x12x8x128xf32>
      %138 = vector.shape_cast %137 : vector<1x1x12x8x128xf32> to vector<12x8x128xf32>
      %139 = vector.shape_cast %136 : vector<12x8x128xf32> to vector<1x1x12x8x128xf32>
      tpu.vector_store %arg5[%c0_130, %c0_131, %c0_132, %c0_133, %c0_134], %139 {strides = array<i32>} : memref<1x1x12x8x128xf32, #tpu.memory_space<vmem>>, vector<1x1x12x8x128xf32>,
    } else {
    }
    %c0 = arith.constant 0 : index
    %c0_1 = arith.constant 0 : index
    %c0_2 = arith.constant 0 : index
    %3 = vector.load %arg4[%c0, %c0_1, %c0_2] : memref<1x8x128xi32, #tpu.memory_space<vmem>>, vector<1x8x128xi32>
    %4 = vector.shape_cast %3 : vector<1x8x128xi32> to vector<8x128xi32>
    %c255_i32 = arith.constant 255 : i32
    %5 = vector.broadcast %c255_i32 : i32 to vector<8x128xi32>
    %6 = arith.cmpi ne, %4, %5 : vector<8x128xi32>
    %7 = arith.extui %6 : vector<8x128xi1> to vector<8x128xi32>
    %8 = arith.sitofp %7 : vector<8x128xi32> to vector<8x128xf32>
    %c0_3 = arith.constant 0 : index
    %c0_4 = arith.constant 0 : index
    %c0_5 = arith.constant 0 : index
    %c0_6 = arith.constant 0 : index
    %9 = vector.load %arg3[%c0_3, %c0_4, %c0_5, %c0_6] : memref<1x4x8x128xf32, #tpu.memory_space<vmem>>, vector<1x1x8x128xf32>
    %10 = vector.shape_cast %9 : vector<1x1x8x128xf32> to vector<8x128xf32>
    %c0_7 = arith.constant 0 : index
    %c1 = arith.constant 1 : index
    %c0_8 = arith.constant 0 : index
    %c0_9 = arith.constant 0 : index
    %11 = vector.load %arg3[%c0_7, %c1, %c0_8, %c0_9] : memref<1x4x8x128xf32, #tpu.memory_space<vmem>>, vector<1x1x8x128xf32>
    %12 = vector.shape_cast %11 : vector<1x1x8x128xf32> to vector<8x128xf32>
    %c0_10 = arith.constant 0 : index
    %c2 = arith.constant 2 : index
    %c0_11 = arith.constant 0 : index
    %c0_12 = arith.constant 0 : index
    %13 = vector.load %arg3[%c0_10, %c2, %c0_11, %c0_12] : memref<1x4x8x128xf32, #tpu.memory_space<vmem>>, vector<1x1x8x128xf32>
    %14 = vector.shape_cast %13 : vector<1x1x8x128xf32> to vector<8x128xf32>
    %c0_13 = arith.constant 0 : index
    %c3 = arith.constant 3 : index
    %c0_14 = arith.constant 0 : index
    %c0_15 = arith.constant 0 : index
    %15 = vector.load %arg3[%c0_13, %c3, %c0_14, %c0_15] : memref<1x4x8x128xf32, #tpu.memory_space<vmem>>, vector<1x1x8x128xf32>
    %16 = vector.shape_cast %15 : vector<1x1x8x128xf32> to vector<8x128xf32>
    %17 = arith.maximumf %10, %12 : vector<8x128xf32>
    %18 = arith.maximumf %17, %14 : vector<8x128xf32>
    %19 = arith.maximumf %18, %16 : vector<8x128xf32>
    %20 = arith.subf %10, %19 : vector<8x128xf32>
    %21 = math.exp %20 : vector<8x128xf32>
    %22 = arith.subf %12, %19 : vector<8x128xf32>
    %23 = math.exp %22 : vector<8x128xf32>
    %24 = arith.subf %14, %19 : vector<8x128xf32>
    %25 = math.exp %24 : vector<8x128xf32>
    %26 = arith.subf %16, %19 : vector<8x128xf32>
    %27 = math.exp %26 : vector<8x128xf32>
    %28 = arith.addf %21, %23 : vector<8x128xf32>
    %29 = arith.addf %28, %25 : vector<8x128xf32>
    %30 = arith.addf %29, %27 : vector<8x128xf32>
    %31 = tpu.reciprocal %30 {approx = true} : vector<8x128xf32> -> vector<8x128xf32>
    %32 = arith.mulf %30, %31 : vector<8x128xf32>
    %cst = arith.constant 2.000000e+00 : f32
    %33 = vector.broadcast %cst : f32 to vector<8x128xf32>
    %34 = arith.subf %33, %32 : vector<8x128xf32>
    %35 = arith.mulf %31, %34 : vector<8x128xf32>
    %36 = arith.mulf %21, %35 : vector<8x128xf32>
    %c0_i32_16 = arith.constant 0 : i32
    %37 = vector.broadcast %c0_i32_16 : i32 to vector<8x128xi32>
    %38 = arith.cmpi eq, %4, %37 : vector<8x128xi32>
    %39 = arith.extui %38 : vector<8x128xi1> to vector<8x128xi32>
    %40 = arith.sitofp %39 : vector<8x128xi32> to vector<8x128xf32>
    %c0_17 = arith.constant 0 : index
    %c0_18 = arith.constant 0 : index
    %c0_19 = arith.constant 0 : index
    %c0_20 = arith.constant 0 : index
    %c0_21 = arith.constant 0 : index
    %41 = vector.load %arg5[%c0_17, %c0_18, %c0_19, %c0_20, %c0_21] : memref<1x1x12x8x128xf32, #tpu.memory_space<vmem>>, vector<1x1x1x8x128xf32>
    %42 = vector.shape_cast %41 : vector<1x1x1x8x128xf32> to vector<8x128xf32>
    %43 = arith.mulf %36, %40 : vector<8x128xf32>
    %44 = arith.addf %42, %43 : vector<8x128xf32>
    %c0_22 = arith.constant 0 : index
    %c0_23 = arith.constant 0 : index
    %c0_24 = arith.constant 0 : index
    %c0_25 = arith.constant 0 : index
    %c0_26 = arith.constant 0 : index
    %45 = vector.load %arg5[%c0_22, %c0_23, %c0_24, %c0_25, %c0_26] : memref<1x1x12x8x128xf32, #tpu.memory_space<vmem>>, vector<1x1x1x8x128xf32>
    %46 = vector.shape_cast %45 : vector<1x1x1x8x128xf32> to vector<8x128xf32>
    %47 = vector.shape_cast %44 : vector<8x128xf32> to vector<1x1x1x8x128xf32>
    tpu.vector_store %arg5[%c0_22, %c0_23, %c0_24, %c0_25, %c0_26], %47 {strides = array<i32>} : memref<1x1x12x8x128xf32, #tpu.memory_space<vmem>>, vector<1x1x1x8x128xf32>,
    %c0_27 = arith.constant 0 : index
    %c0_28 = arith.constant 0 : index
    %c4 = arith.constant 4 : index
    %c0_29 = arith.constant 0 : index
    %c0_30 = arith.constant 0 : index
    %48 = vector.load %arg5[%c0_27, %c0_28, %c4, %c0_29, %c0_30] : memref<1x1x12x8x128xf32, #tpu.memory_space<vmem>>, vector<1x1x1x8x128xf32>
    %49 = vector.shape_cast %48 : vector<1x1x1x8x128xf32> to vector<8x128xf32>
    %50 = arith.mulf %36, %8 : vector<8x128xf32>
    %51 = arith.addf %49, %50 : vector<8x128xf32>
    %c0_31 = arith.constant 0 : index
    %c0_32 = arith.constant 0 : index
    %c4_33 = arith.constant 4 : index
    %c0_34 = arith.constant 0 : index
    %c0_35 = arith.constant 0 : index
    %52 = vector.load %arg5[%c0_31, %c0_32, %c4_33, %c0_34, %c0_35] : memref<1x1x12x8x128xf32, #tpu.memory_space<vmem>>, vector<1x1x1x8x128xf32>
    %53 = vector.shape_cast %52 : vector<1x1x1x8x128xf32> to vector<8x128xf32>
    %54 = vector.shape_cast %51 : vector<8x128xf32> to vector<1x1x1x8x128xf32>
    tpu.vector_store %arg5[%c0_31, %c0_32, %c4_33, %c0_34, %c0_35], %54 {strides = array<i32>} : memref<1x1x12x8x128xf32, #tpu.memory_space<vmem>>, vector<1x1x1x8x128xf32>,
    %c0_36 = arith.constant 0 : index
    %c0_37 = arith.constant 0 : index
    %c8 = arith.constant 8 : index
    %c0_38 = arith.constant 0 : index
    %c0_39 = arith.constant 0 : index
    %55 = vector.load %arg5[%c0_36, %c0_37, %c8, %c0_38, %c0_39] : memref<1x1x12x8x128xf32, #tpu.memory_space<vmem>>, vector<1x1x1x8x128xf32>
    %56 = vector.shape_cast %55 : vector<1x1x1x8x128xf32> to vector<8x128xf32>
    %57 = arith.addf %56, %40 : vector<8x128xf32>
    %c0_40 = arith.constant 0 : index
    %c0_41 = arith.constant 0 : index
    %c8_42 = arith.constant 8 : index
    %c0_43 = arith.constant 0 : index
    %c0_44 = arith.constant 0 : index
    %58 = vector.load %arg5[%c0_40, %c0_41, %c8_42, %c0_43, %c0_44] : memref<1x1x12x8x128xf32, #tpu.memory_space<vmem>>, vector<1x1x1x8x128xf32>
    %59 = vector.shape_cast %58 : vector<1x1x1x8x128xf32> to vector<8x128xf32>
    %60 = vector.shape_cast %57 : vector<8x128xf32> to vector<1x1x1x8x128xf32>
    tpu.vector_store %arg5[%c0_40, %c0_41, %c8_42, %c0_43, %c0_44], %60 {strides = array<i32>} : memref<1x1x12x8x128xf32, #tpu.memory_space<vmem>>, vector<1x1x1x8x128xf32>,
    %61 = arith.mulf %23, %35 : vector<8x128xf32>
    %c1_i32 = arith.constant 1 : i32
    %62 = vector.broadcast %c1_i32 : i32 to vector<8x128xi32>
    %63 = arith.cmpi eq, %4, %62 : vector<8x128xi32>
    %64 = arith.extui %63 : vector<8x128xi1> to vector<8x128xi32>
    %65 = arith.sitofp %64 : vector<8x128xi32> to vector<8x128xf32>
    %c0_45 = arith.constant 0 : index
    %c0_46 = arith.constant 0 : index
    %c1_47 = arith.constant 1 : index
    %c0_48 = arith.constant 0 : index
    %c0_49 = arith.constant 0 : index
    %66 = vector.load %arg5[%c0_45, %c0_46, %c1_47, %c0_48, %c0_49] : memref<1x1x12x8x128xf32, #tpu.memory_space<vmem>>, vector<1x1x1x8x128xf32>
    %67 = vector.shape_cast %66 : vector<1x1x1x8x128xf32> to vector<8x128xf32>
    %68 = arith.mulf %61, %65 : vector<8x128xf32>
    %69 = arith.addf %67, %68 : vector<8x128xf32>
    %c0_50 = arith.constant 0 : index
    %c0_51 = arith.constant 0 : index
    %c1_52 = arith.constant 1 : index
    %c0_53 = arith.constant 0 : index
    %c0_54 = arith.constant 0 : index
    %70 = vector.load %arg5[%c0_50, %c0_51, %c1_52, %c0_53, %c0_54] : memref<1x1x12x8x128xf32, #tpu.memory_space<vmem>>, vector<1x1x1x8x128xf32>
    %71 = vector.shape_cast %70 : vector<1x1x1x8x128xf32> to vector<8x128xf32>
    %72 = vector.shape_cast %69 : vector<8x128xf32> to vector<1x1x1x8x128xf32>
    tpu.vector_store %arg5[%c0_50, %c0_51, %c1_52, %c0_53, %c0_54], %72 {strides = array<i32>} : memref<1x1x12x8x128xf32, #tpu.memory_space<vmem>>, vector<1x1x1x8x128xf32>,
    %c0_55 = arith.constant 0 : index
    %c0_56 = arith.constant 0 : index
    %c5 = arith.constant 5 : index
    %c0_57 = arith.constant 0 : index
    %c0_58 = arith.constant 0 : index
    %73 = vector.load %arg5[%c0_55, %c0_56, %c5, %c0_57, %c0_58] : memref<1x1x12x8x128xf32, #tpu.memory_space<vmem>>, vector<1x1x1x8x128xf32>
    %74 = vector.shape_cast %73 : vector<1x1x1x8x128xf32> to vector<8x128xf32>
    %75 = arith.mulf %61, %8 : vector<8x128xf32>
    %76 = arith.addf %74, %75 : vector<8x128xf32>
    %c0_59 = arith.constant 0 : index
    %c0_60 = arith.constant 0 : index
    %c5_61 = arith.constant 5 : index
    %c0_62 = arith.constant 0 : index
    %c0_63 = arith.constant 0 : index
    %77 = vector.load %arg5[%c0_59, %c0_60, %c5_61, %c0_62, %c0_63] : memref<1x1x12x8x128xf32, #tpu.memory_space<vmem>>, vector<1x1x1x8x128xf32>
    %78 = vector.shape_cast %77 : vector<1x1x1x8x128xf32> to vector<8x128xf32>
    %79 = vector.shape_cast %76 : vector<8x128xf32> to vector<1x1x1x8x128xf32>
    tpu.vector_store %arg5[%c0_59, %c0_60, %c5_61, %c0_62, %c0_63], %79 {strides = array<i32>} : memref<1x1x12x8x128xf32, #tpu.memory_space<vmem>>, vector<1x1x1x8x128xf32>,
    %c0_64 = arith.constant 0 : index
    %c0_65 = arith.constant 0 : index
    %c9 = arith.constant 9 : index
    %c0_66 = arith.constant 0 : index
    %c0_67 = arith.constant 0 : index
    %80 = vector.load %arg5[%c0_64, %c0_65, %c9, %c0_66, %c0_67] : memref<1x1x12x8x128xf32, #tpu.memory_space<vmem>>, vector<1x1x1x8x128xf32>
    %81 = vector.shape_cast %80 : vector<1x1x1x8x128xf32> to vector<8x128xf32>
    %82 = arith.addf %81, %65 : vector<8x128xf32>
    %c0_68 = arith.constant 0 : index
    %c0_69 = arith.constant 0 : index
    %c9_70 = arith.constant 9 : index
    %c0_71 = arith.constant 0 : index
    %c0_72 = arith.constant 0 : index
    %83 = vector.load %arg5[%c0_68, %c0_69, %c9_70, %c0_71, %c0_72] : memref<1x1x12x8x128xf32, #tpu.memory_space<vmem>>, vector<1x1x1x8x128xf32>
    %84 = vector.shape_cast %83 : vector<1x1x1x8x128xf32> to vector<8x128xf32>
    %85 = vector.shape_cast %82 : vector<8x128xf32> to vector<1x1x1x8x128xf32>
    tpu.vector_store %arg5[%c0_68, %c0_69, %c9_70, %c0_71, %c0_72], %85 {strides = array<i32>} : memref<1x1x12x8x128xf32, #tpu.memory_space<vmem>>, vector<1x1x1x8x128xf32>,
    %86 = arith.mulf %25, %35 : vector<8x128xf32>
    %c2_i32 = arith.constant 2 : i32
    %87 = vector.broadcast %c2_i32 : i32 to vector<8x128xi32>
    %88 = arith.cmpi eq, %4, %87 : vector<8x128xi32>
    %89 = arith.extui %88 : vector<8x128xi1> to vector<8x128xi32>
    %90 = arith.sitofp %89 : vector<8x128xi32> to vector<8x128xf32>
    %c0_73 = arith.constant 0 : index
    %c0_74 = arith.constant 0 : index
    %c2_75 = arith.constant 2 : index
    %c0_76 = arith.constant 0 : index
    %c0_77 = arith.constant 0 : index
    %91 = vector.load %arg5[%c0_73, %c0_74, %c2_75, %c0_76, %c0_77] : memref<1x1x12x8x128xf32, #tpu.memory_space<vmem>>, vector<1x1x1x8x128xf32>
    %92 = vector.shape_cast %91 : vector<1x1x1x8x128xf32> to vector<8x128xf32>
    %93 = arith.mulf %86, %90 : vector<8x128xf32>
    %94 = arith.addf %92, %93 : vector<8x128xf32>
    %c0_78 = arith.constant 0 : index
    %c0_79 = arith.constant 0 : index
    %c2_80 = arith.constant 2 : index
    %c0_81 = arith.constant 0 : index
    %c0_82 = arith.constant 0 : index
    %95 = vector.load %arg5[%c0_78, %c0_79, %c2_80, %c0_81, %c0_82] : memref<1x1x12x8x128xf32, #tpu.memory_space<vmem>>, vector<1x1x1x8x128xf32>
    %96 = vector.shape_cast %95 : vector<1x1x1x8x128xf32> to vector<8x128xf32>
    %97 = vector.shape_cast %94 : vector<8x128xf32> to vector<1x1x1x8x128xf32>
    tpu.vector_store %arg5[%c0_78, %c0_79, %c2_80, %c0_81, %c0_82], %97 {strides = array<i32>} : memref<1x1x12x8x128xf32, #tpu.memory_space<vmem>>, vector<1x1x1x8x128xf32>,
    %c0_83 = arith.constant 0 : index
    %c0_84 = arith.constant 0 : index
    %c6 = arith.constant 6 : index
    %c0_85 = arith.constant 0 : index
    %c0_86 = arith.constant 0 : index
    %98 = vector.load %arg5[%c0_83, %c0_84, %c6, %c0_85, %c0_86] : memref<1x1x12x8x128xf32, #tpu.memory_space<vmem>>, vector<1x1x1x8x128xf32>
    %99 = vector.shape_cast %98 : vector<1x1x1x8x128xf32> to vector<8x128xf32>
    %100 = arith.mulf %86, %8 : vector<8x128xf32>
    %101 = arith.addf %99, %100 : vector<8x128xf32>
    %c0_87 = arith.constant 0 : index
    %c0_88 = arith.constant 0 : index
    %c6_89 = arith.constant 6 : index
    %c0_90 = arith.constant 0 : index
    %c0_91 = arith.constant 0 : index
    %102 = vector.load %arg5[%c0_87, %c0_88, %c6_89, %c0_90, %c0_91] : memref<1x1x12x8x128xf32, #tpu.memory_space<vmem>>, vector<1x1x1x8x128xf32>
    %103 = vector.shape_cast %102 : vector<1x1x1x8x128xf32> to vector<8x128xf32>
    %104 = vector.shape_cast %101 : vector<8x128xf32> to vector<1x1x1x8x128xf32>
    tpu.vector_store %arg5[%c0_87, %c0_88, %c6_89, %c0_90, %c0_91], %104 {strides = array<i32>} : memref<1x1x12x8x128xf32, #tpu.memory_space<vmem>>, vector<1x1x1x8x128xf32>,
    %c0_92 = arith.constant 0 : index
    %c0_93 = arith.constant 0 : index
    %c10 = arith.constant 10 : index
    %c0_94 = arith.constant 0 : index
    %c0_95 = arith.constant 0 : index
    %105 = vector.load %arg5[%c0_92, %c0_93, %c10, %c0_94, %c0_95] : memref<1x1x12x8x128xf32, #tpu.memory_space<vmem>>, vector<1x1x1x8x128xf32>
    %106 = vector.shape_cast %105 : vector<1x1x1x8x128xf32> to vector<8x128xf32>
    %107 = arith.addf %106, %90 : vector<8x128xf32>
    %c0_96 = arith.constant 0 : index
    %c0_97 = arith.constant 0 : index
    %c10_98 = arith.constant 10 : index
    %c0_99 = arith.constant 0 : index
    %c0_100 = arith.constant 0 : index
    %108 = vector.load %arg5[%c0_96, %c0_97, %c10_98, %c0_99, %c0_100] : memref<1x1x12x8x128xf32, #tpu.memory_space<vmem>>, vector<1x1x1x8x128xf32>
    %109 = vector.shape_cast %108 : vector<1x1x1x8x128xf32> to vector<8x128xf32>
    %110 = vector.shape_cast %107 : vector<8x128xf32> to vector<1x1x1x8x128xf32>
    tpu.vector_store %arg5[%c0_96, %c0_97, %c10_98, %c0_99, %c0_100], %110 {strides = array<i32>} : memref<1x1x12x8x128xf32, #tpu.memory_space<vmem>>, vector<1x1x1x8x128xf32>,
    %111 = arith.mulf %27, %35 : vector<8x128xf32>
    %c3_i32 = arith.constant 3 : i32
    %112 = vector.broadcast %c3_i32 : i32 to vector<8x128xi32>
    %113 = arith.cmpi eq, %4, %112 : vector<8x128xi32>
    %114 = arith.extui %113 : vector<8x128xi1> to vector<8x128xi32>
    %115 = arith.sitofp %114 : vector<8x128xi32> to vector<8x128xf32>
    %c0_101 = arith.constant 0 : index
    %c0_102 = arith.constant 0 : index
    %c3_103 = arith.constant 3 : index
    %c0_104 = arith.constant 0 : index
    %c0_105 = arith.constant 0 : index
    %116 = vector.load %arg5[%c0_101, %c0_102, %c3_103, %c0_104, %c0_105] : memref<1x1x12x8x128xf32, #tpu.memory_space<vmem>>, vector<1x1x1x8x128xf32>
    %117 = vector.shape_cast %116 : vector<1x1x1x8x128xf32> to vector<8x128xf32>
    %118 = arith.mulf %111, %115 : vector<8x128xf32>
    %119 = arith.addf %117, %118 : vector<8x128xf32>
    %c0_106 = arith.constant 0 : index
    %c0_107 = arith.constant 0 : index
    %c3_108 = arith.constant 3 : index
    %c0_109 = arith.constant 0 : index
    %c0_110 = arith.constant 0 : index
    %120 = vector.load %arg5[%c0_106, %c0_107, %c3_108, %c0_109, %c0_110] : memref<1x1x12x8x128xf32, #tpu.memory_space<vmem>>, vector<1x1x1x8x128xf32>
    %121 = vector.shape_cast %120 : vector<1x1x1x8x128xf32> to vector<8x128xf32>
    %122 = vector.shape_cast %119 : vector<8x128xf32> to vector<1x1x1x8x128xf32>
    tpu.vector_store %arg5[%c0_106, %c0_107, %c3_108, %c0_109, %c0_110], %122 {strides = array<i32>} : memref<1x1x12x8x128xf32, #tpu.memory_space<vmem>>, vector<1x1x1x8x128xf32>,
    %c0_111 = arith.constant 0 : index
    %c0_112 = arith.constant 0 : index
    %c7 = arith.constant 7 : index
    %c0_113 = arith.constant 0 : index
    %c0_114 = arith.constant 0 : index
    %123 = vector.load %arg5[%c0_111, %c0_112, %c7, %c0_113, %c0_114] : memref<1x1x12x8x128xf32, #tpu.memory_space<vmem>>, vector<1x1x1x8x128xf32>
    %124 = vector.shape_cast %123 : vector<1x1x1x8x128xf32> to vector<8x128xf32>
    %125 = arith.mulf %111, %8 : vector<8x128xf32>
    %126 = arith.addf %124, %125 : vector<8x128xf32>
    %c0_115 = arith.constant 0 : index
    %c0_116 = arith.constant 0 : index
    %c7_117 = arith.constant 7 : index
    %c0_118 = arith.constant 0 : index
    %c0_119 = arith.constant 0 : index
    %127 = vector.load %arg5[%c0_115, %c0_116, %c7_117, %c0_118, %c0_119] : memref<1x1x12x8x128xf32, #tpu.memory_space<vmem>>, vector<1x1x1x8x128xf32>
    %128 = vector.shape_cast %127 : vector<1x1x1x8x128xf32> to vector<8x128xf32>
    %129 = vector.shape_cast %126 : vector<8x128xf32> to vector<1x1x1x8x128xf32>
    tpu.vector_store %arg5[%c0_115, %c0_116, %c7_117, %c0_118, %c0_119], %129 {strides = array<i32>} : memref<1x1x12x8x128xf32, #tpu.memory_space<vmem>>, vector<1x1x1x8x128xf32>,
    %c0_120 = arith.constant 0 : index
    %c0_121 = arith.constant 0 : index
    %c11 = arith.constant 11 : index
    %c0_122 = arith.constant 0 : index
    %c0_123 = arith.constant 0 : index
    %130 = vector.load %arg5[%c0_120, %c0_121, %c11, %c0_122, %c0_123] : memref<1x1x12x8x128xf32, #tpu.memory_space<vmem>>, vector<1x1x1x8x128xf32>
    %131 = vector.shape_cast %130 : vector<1x1x1x8x128xf32> to vector<8x128xf32>
    %132 = arith.addf %131, %115 : vector<8x128xf32>
    %c0_124 = arith.constant 0 : index
    %c0_125 = arith.constant 0 : index
    %c11_126 = arith.constant 11 : index
    %c0_127 = arith.constant 0 : index
    %c0_128 = arith.constant 0 : index
    %133 = vector.load %arg5[%c0_124, %c0_125, %c11_126, %c0_127, %c0_128] : memref<1x1x12x8x128xf32, #tpu.memory_space<vmem>>, vector<1x1x1x8x128xf32>
    %134 = vector.shape_cast %133 : vector<1x1x1x8x128xf32> to vector<8x128xf32>
    %135 = vector.shape_cast %132 : vector<8x128xf32> to vector<1x1x1x8x128xf32>
    tpu.vector_store %arg5[%c0_124, %c0_125, %c11_126, %c0_127, %c0_128], %135 {strides = array<i32>} : memref<1x1x12x8x128xf32, #tpu.memory_space<vmem>>, vector<1x1x1x8x128xf32>,
    return
  }
  func.func @transform_0(%arg0: i32, %arg1: i32, %arg2: i32) -> (i32, i32, i32, i32) {
    %c1_i32 = arith.constant 1 : i32
    %0 = arith.muli %arg1, %c1_i32 : i32
    %1 = arith.addi %0, %arg2 : i32
    %c0_i32 = arith.constant 0 : i32
    %c0_i32_0 = arith.constant 0 : i32
    %c0_i32_1 = arith.constant 0 : i32
    return %arg0, %c0_i32, %1, %c0_i32_0 : i32, i32, i32, i32
  }
  func.func @transform_1(%arg0: i32, %arg1: i32, %arg2: i32) -> (i32, i32, i32) {
    %c1_i32 = arith.constant 1 : i32
    %0 = arith.muli %arg1, %c1_i32 : i32
    %1 = arith.addi %0, %arg2 : i32
    %c0_i32 = arith.constant 0 : i32
    %c0_i32_0 = arith.constant 0 : i32
    return %arg0, %1, %c0_i32 : i32, i32, i32
  }
  func.func @transform_2(%arg0: i32, %arg1: i32, %arg2: i32) -> (i32, i32, i32, i32, i32) {
    %c0_i32 = arith.constant 0 : i32
    %c0_i32_0 = arith.constant 0 : i32
    %c0_i32_1 = arith.constant 0 : i32
    %c0_i32_2 = arith.constant 0 : i32
    return %arg0, %arg1, %c0_i32, %c0_i32_0, %c0_i32_1 : i32, i32, i32, i32, i32
  }
}

</mosaic_0001>

<llo_original>
// kernel: tpu_custom_call.1
$region0: #{tpu_custom_call.1}
  #allocation0 [shape = 'u32[]', space=smem, size = 0x4, offset = 0x4, fixed_abs, tag = 'smem constant byte address 0x4 - core index']
  #allocation1 [shape = 'u32[144,128]{1,0:T(1,128)}', space=vmem, size = 0x12000, scoped, tag = 'internal scratch']
  %s0 = inlined_call_operand.hbm [shape: f32[2,4,8,128], index: 0, kind: input, shape index: {}]
  %s1 = inlined_call_operand.hbm [shape: s32[2,8,128], index: 1, kind: input, shape index: {}]
  %s2 = inlined_call_operand.hbm [shape: f32[2,1,12,8,128], index: 2, kind: output, shape index: {}]
  %s3 = sld [smem:[#allocation0]]
  $region53: #{tpu_custom_call.1} parent=0
    _
  %s5 = ssub.s32 1, %s3
  %s6 = scalar_select 0, %s5, %s3
  $region1: #{tpu_custom_call.1} parent=0
    #allocation2 [shape = 'u8[32768]{0}', space=vmem, size = 0x8000, scoped, tag = 'input window, operand 0']
    #allocation3 [shape = 's32[2]{0}', space=sflag, size = 0x8, scoped, tag = 'scoped memory for tpu_custom_call.1']
    #allocation4 [shape = 's32[2]{0}', space=sflag, size = 0x8, scoped, tag = 'scoped memory for tpu_custom_call.1']
    #allocation5 [shape = 'u8[8192]{0}', space=vmem, size = 0x2000, scoped, tag = 'input window, operand 1']
    #allocation6 [shape = 's32[2]{0}', space=sflag, size = 0x8, scoped, tag = 'scoped memory for tpu_custom_call.1']
    #allocation7 [shape = 'u8[98304]{0}', space=vmem, size = 0x18000, scoped, tag = 'output window, operand 0']
    %7 = vsyncpa [#allocation3], 0
    %s8 = scalar_lea.sflag [#allocation3], 1
    %9 = vsyncpa %s8, 0
    %10 = vsyncpa [#allocation6], 0
    %s11 = scalar_lea.sflag [#allocation6], 1
    %12 = vsyncpa %s11, 0
    %13 = vsyncpa [#allocation4], 0
    %s14 = scalar_lea.sflag [#allocation4], 1
    %15 = vsyncpa %s14, 0
    loop: start=0, step=1, limit=4
    $region2: #{tpu_custom_call.1} parent=1 // loop_pre_header
      _
    $region3: #{tpu_custom_call.1} parent=1 // loop_header
      %s17 = sphi 0, %s21
      %p18 = scmp.ge.s32.totalorder %s17, 4
      %s24 = sphi 0, %s43
      %s25 = sphi 0, %s39
      %s26 = sphi 0, %s35
      %s27 = sphi 0, %s24
      %s28 = sphi 0, %s25
      %s29 = sphi 0, %s26
      %s30 = sphi 0, %s27
      %s31 = sphi 0, %s28
      %s32 = sphi 0, %s29
      %s50 = sphi 0, %s52
      %s53 = sphi 0, %s50
      %s54 = sphi 0, %s53
      %s70 = sphi 0, %s54
      %s80 = sphi 0, %s82
      %s83 = sphi 0, %s80
      %s84 = sphi 0, %s83
      %s100 = sphi 0, %s84
      %s108 = sphi 0, %s110
      %s111 = sphi 0, %s108
      %s112 = sphi 0, %s111
      %s128 = sphi 0, %s112
    $region4: #{tpu_custom_call.1} parent=1 // loop_header_branch
      %20 = sbr.rel (%p18) target = $region8
    $region5: #{tpu_custom_call.1} parent=1 // loop_body
      %s22 = ssub.s32 %s17, 1
      %s23 = ssub.s32 %s17, 2
      %s33 = sadd.s32 1, %s26
      %p34 = scmp.ge.s32.totalorder %s33, 1
      %s35 = scalar_select %p34, 0, %s33
      %s36 = sadd.s32 1, %s25
      %s37 = scalar_select %p34, %s36, %s25
      %p38 = scmp.ge.s32.totalorder %s37, 1
      %s39 = scalar_select %p38, 0, %s37
      %s40 = sadd.s32 1, %s24
      %s41 = scalar_select %p38, %s40, %s24
      %p42 = scmp.ge.s32.totalorder %s41, 2
      %s43 = scalar_select %p42, 0, %s41
      %s44 = sadd.s32 %s25, %s26
      %s45 = sadd.s32 %s39, %s35
      %s46 = ssub.s32 %s24, %s43
      %s47 = ssub.s32 %s44, %s45
      %s48 = sor.u32 %s46, %s47
      %p49 = scmp.eq.s32.totalorder %s48, 0
      %s51 = sadd.s32 %s50, 1
      %s52 = scalar_select %p49, %s50, %s51
      %p55 = pneg %p49
      %p56 = scmp.eq.s32.totalorder %s17, 1
      %p57 = por %p55, %p56
      %p58 = scmp.ne.s32.totalorder %s50, %s53
      %p59 = scmp.eq.s32.totalorder %s17, 0
      %p60 = por %p58, %p59
      %p61 = scmp.ne.s32.totalorder %s50, %s53
      %p62 = scmp.eq.s32.totalorder %s22, 1
      %p63 = por %p61, %p62
      %p64 = scmp.ne.s32.totalorder %s53, %s54
      %p65 = scmp.eq.s32.totalorder %s22, 0
      %p66 = por %p64, %p65
      %p67 = scmp.ne.s32.totalorder %s53, %s54
      %p68 = scmp.eq.s32.totalorder %s23, 1
      %p69 = por %p67, %p68
      %p71 = scmp.ne.s32.totalorder %s54, %s70
      %p72 = scmp.eq.s32.totalorder %s23, 0
      %p73 = por %p71, %p72
      %s74 = sadd.s32 %s25, %s26
      %s75 = sadd.s32 %s39, %s35
      %s76 = ssub.s32 %s24, %s43
      %s77 = ssub.s32 %s74, %s75
      %s78 = sor.u32 %s76, %s77
      %p79 = scmp.eq.s32.totalorder %s78, 0
      %s81 = sadd.s32 %s80, 1
      %s82 = scalar_select %p79, %s80, %s81
      %p85 = pneg %p79
      %p86 = scmp.eq.s32.totalorder %s17, 1
      %p87 = por %p85, %p86
      %p88 = scmp.ne.s32.totalorder %s80, %s83
      %p89 = scmp.eq.s32.totalorder %s17, 0
      %p90 = por %p88, %p89
      %p91 = scmp.ne.s32.totalorder %s80, %s83
      %p92 = scmp.eq.s32.totalorder %s22, 1
      %p93 = por %p91, %p92
      %p94 = scmp.ne.s32.totalorder %s83, %s84
      %p95 = scmp.eq.s32.totalorder %s22, 0
      %p96 = por %p94, %p95
      %p97 = scmp.ne.s32.totalorder %s83, %s84
      %p98 = scmp.eq.s32.totalorder %s23, 1
      %p99 = por %p97, %p98
      %p101 = scmp.ne.s32.totalorder %s84, %s100
      %p102 = scmp.eq.s32.totalorder %s23, 0
      %p103 = por %p101, %p102
      %s104 = ssub.s32 %s24, %s43
      %s105 = ssub.s32 %s25, %s39
      %s106 = sor.u32 %s104, %s105
      %p107 = scmp.eq.s32.totalorder %s106, 0
      %s109 = sadd.s32 %s108, 1
      %s110 = scalar_select %p107, %s108, %s109
      %p113 = pneg %p107
      %p114 = scmp.eq.s32.totalorder %s17, 1
      %p115 = por %p113, %p114
      %p116 = scmp.ne.s32.totalorder %s108, %s111
      %p117 = scmp.eq.s32.totalorder %s17, 0
      %p118 = por %p116, %p117
      %p119 = scmp.ne.s32.totalorder %s108, %s111
      %p120 = scmp.eq.s32.totalorder %s22, 1
      %p121 = por %p119, %p120
      %p122 = scmp.ne.s32.totalorder %s111, %s112
      %p123 = scmp.eq.s32.totalorder %s22, 0
      %p124 = por %p122, %p123
      %p125 = scmp.ne.s32.totalorder %s111, %s112
      %p126 = scmp.eq.s32.totalorder %s23, 1
      %p127 = por %p125, %p126
      %p129 = scmp.ne.s32.totalorder %s112, %s128
      %p130 = scmp.eq.s32.totalorder %s23, 0
      %p131 = por %p129, %p130
      %p132 = scmp.le.s32.totalorder 1, %s17
      %p133 = scmp.lt.s32.totalorder %s17, 3
      %p134 = pnand %p132, %p133
      %p135 = pneg %p134
      // Predicated region
      $region9: #{tpu_custom_call.1} parent=5 // pred_check
        _
      $region10: #{tpu_custom_call.1} parent=5 // pred_check_branch
        %137 = sbr.rel (%p134) target = $region12
      $region11: #{tpu_custom_call.1} parent=5 // pred_region
        %s138 = ssub.s32 %s17, 1
      $region12: #{tpu_custom_call.1} parent=5 // pred_fallthru
        _
      %p139 = scmp.lt.s32.totalorder %s17, 2
      // Predicated region
      $region13: #{tpu_custom_call.1} parent=5 // pred_check
        %p140 = pneg %p139
      $region14: #{tpu_custom_call.1} parent=5 // pred_check_branch
        %142 = sbr.rel (%p140) target = $region16
      $region15: #{tpu_custom_call.1} parent=5 // pred_region
        // Predicated region
        $region17: #{tpu_custom_call.1} parent=15 // pred_check
          %p143 = pneg %p60
        $region18: #{tpu_custom_call.1} parent=15 // pred_check_branch
          %145 = sbr.rel (%p143) target = $region20
        $region19: #{tpu_custom_call.1} parent=15 // pred_region
          %s146 = sand.u32 %s50, 1
          %s147 = scalar_lea.sflag [#allocation3], %s146
          %s148 = sand.u32 %s50, 1
          %s149 = smul.addr %s148, 32
          %s150 = scalar_lea.vmem [#allocation2], %s149
          %s151 = sadd.s32 %s25, %s26
          %s153 = ssub.s32 512, 512
          %154 = vsyncadd %s147, %s153
          %s155 = smul.addr %s24, 4
          %s156 = sadd.s32 %s151, %s155
          %s157 = smul.addr %s156, 128
          %s158 = scalar_lea.hbm %s0, %s157
          %s159 = sshll.u32 %s150, 4
          %s160 = int_to_ptr.vmem [resolvable:$true] %s159
          %165 = dma.hbm_to_vmem [thread:$0]  %s158, 512, %s160, %s147, 128, 128, 8
        $region20: #{tpu_custom_call.1} parent=15 // pred_fallthru
          _
        // Predicated region
        $region21: #{tpu_custom_call.1} parent=15 // pred_check
          %p166 = pneg %p90
        $region22: #{tpu_custom_call.1} parent=15 // pred_check_branch
          %168 = sbr.rel (%p166) target = $region24
        $region23: #{tpu_custom_call.1} parent=15 // pred_region
          %s169 = sand.u32 %s80, 1
          %s170 = scalar_lea.sflag [#allocation6], %s169
          %s171 = sand.u32 %s80, 1
          %s172 = smul.addr %s171, 8
          %s173 = scalar_lea.vmem [#allocation5], %s172
          %s174 = sadd.s32 %s25, %s26
          %s176 = ssub.s32 128, 128
          %177 = vsyncadd %s170, %s176
          %s178 = sadd.s32 %s174, %s24
          %s179 = smul.addr %s178, 128
          %s180 = scalar_lea.hbm %s1, %s179
          %s182 = sshll.u32 %s173, 4
          %s183 = int_to_ptr.vmem [resolvable:$true] %s182
          %185 = dma.hbm_to_vmem [thread:$0]  %s180, 128, %s183, %s170
        $region24: #{tpu_custom_call.1} parent=15 // pred_fallthru
          _
      $region16: #{tpu_custom_call.1} parent=5 // pred_fallthru
        _
      %p186 = scmp.le.s32.totalorder 1, %s17
      %p187 = scmp.lt.s32.totalorder %s17, 3
      %p188 = pnand %p186, %p187
      %p189 = pneg %p188
      // Predicated region
      $region25: #{tpu_custom_call.1} parent=5 // pred_check
        _
      $region26: #{tpu_custom_call.1} parent=5 // pred_check_branch
        %191 = sbr.rel (%p188) target = $region28
      $region27: #{tpu_custom_call.1} parent=5 // pred_region
        %s192 = ssub.s32 %s17, 1
        %s193 = sand.u32 %s53, 1
        %s194 = scalar_lea.sflag [#allocation3], %s193
        %s195 = sand.u32 %s53, 1
        %s196 = smul.addr %s195, 32
        %s197 = scalar_lea.vmem [#allocation2], %s196
        // Predicated region
        $region29: #{tpu_custom_call.1} parent=27 // pred_check
          %p198 = pneg %p66
        $region30: #{tpu_custom_call.1} parent=27 // pred_check_branch
          %200 = sbr.rel (%p198) target = $region32
        $region31: #{tpu_custom_call.1} parent=27 // pred_region
          %201 = dma.done %s194, 512
        $region32: #{tpu_custom_call.1} parent=27 // pred_fallthru
          _
        %s202 = sand.u32 %s83, 1
        %s203 = scalar_lea.sflag [#allocation6], %s202
        %s204 = sand.u32 %s83, 1
        %s205 = smul.addr %s204, 8
        %s206 = scalar_lea.vmem [#allocation5], %s205
        // Predicated region
        $region33: #{tpu_custom_call.1} parent=27 // pred_check
          %p207 = pneg %p96
        $region34: #{tpu_custom_call.1} parent=27 // pred_check_branch
          %209 = sbr.rel (%p207) target = $region36
        $region35: #{tpu_custom_call.1} parent=27 // pred_region
          %210 = dma.done %s203, 128
        $region36: #{tpu_custom_call.1} parent=27 // pred_fallthru
          _
        %s211 = sand.u32 %s53, 1
        %s212 = scalar_lea.sflag [#allocation3], %s211
        %s213 = sand.u32 %s53, 1
        %s214 = smul.addr %s213, 32
        %s215 = scalar_lea.vmem [#allocation2], %s214
        %p216 = pneg %p66
        %p217 = pneg %p63
        %s218 = sand.u32 %s83, 1
        %s219 = scalar_lea.sflag [#allocation6], %s218
        %s220 = sand.u32 %s83, 1
        %s221 = smul.addr %s220, 8
        %s222 = scalar_lea.vmem [#allocation5], %s221
        %p223 = pneg %p96
        %p224 = pneg %p93
        %p225 = pneg %p124
        %p226 = pneg %p121
        %s227 = sand.u32 %s111, 1
        %s228 = scalar_lea.sflag [#allocation4], %s227
        %s229 = sand.u32 %s111, 1
        %s230 = smul.addr %s229, 96
        %s231 = scalar_lea.vmem [#allocation7], %s230
        %s232 = sadd.s32 %s28, %s29
        %s233 = sadd.s32 %s28, %s29
        %p234 = scmp.eq.s32.totalorder %s29, 0
        // Predicated region
        $region37: #{tpu_custom_call.1} parent=27 // pred_check
          %p235 = pneg %p234
        $region38: #{tpu_custom_call.1} parent=27 // pred_check_branch
          %237 = sbr.rel (%p235) target = $region40
        $region39: #{tpu_custom_call.1} parent=27 // pred_region
          %238 = vst [vmem:[%s231] sm:$0xff] 0.0
          %239 = vst [vmem:[%s231 + $0x8] sm:$0xff] 0.0
          %240 = vst [vmem:[%s231 + $0x10] sm:$0xff] 0.0
          %241 = vst [vmem:[%s231 + $0x18] sm:$0xff] 0.0
          %242 = vst [vmem:[%s231 + $0x20] sm:$0xff] 0.0
          %243 = vst [vmem:[%s231 + $0x28] sm:$0xff] 0.0
          %244 = vst [vmem:[%s231 + $0x30] sm:$0xff] 0.0
          %245 = vst [vmem:[%s231 + $0x38] sm:$0xff] 0.0
          %246 = vst [vmem:[%s231 + $0x40] sm:$0xff] 0.0
          %247 = vst [vmem:[%s231 + $0x48] sm:$0xff] 0.0
          %248 = vst [vmem:[%s231 + $0x50] sm:$0xff] 0.0
          %249 = vst [vmem:[%s231 + $0x58] sm:$0xff] 0.0
        $region40: #{tpu_custom_call.1} parent=27 // pred_fallthru
          _
        %v250 = vld [vmem:[%s206] sm:$0xff]
        %vm251 = vcmp.ne.s32.totalorder %v250, 255
        %v252 = vsel %vm251, 1, 0
        %v253 = vcvt.s32.f32 %v252
        %v254 = vld [vmem:[%s197] sm:$0xff]
        %s255 = scalar_lea.vmem %s197, 8 [#allocation2]
        %v256 = vld [vmem:[%s255] sm:$0xff]
        %s257 = scalar_lea.vmem %s197, 16 [#allocation2]
        %v258 = vld [vmem:[%s257] sm:$0xff]
        %s259 = scalar_lea.vmem %s197, 24 [#allocation2]
        %v260 = vld [vmem:[%s259] sm:$0xff]
        %v261 = vmax.f32 %v254, %v256
        %v262 = vmax.f32 %v261, %v258
        %v263 = vmax.f32 %v262, %v260
        %v264 = vsub.f32 %v254, %v263
        %v265 = vmul.f32 %v264, 1.442695
        %v266 = vpow.pop %v265
        %v267 = vsub.f32 %v256, %v263
        %v268 = vmul.f32 %v267, 1.442695
        %v269 = vpow.pop %v268
        %v270 = vsub.f32 %v258, %v263
        %v271 = vmul.f32 %v270, 1.442695
        %v272 = vpow.pop %v271
        %v273 = vsub.f32 %v260, %v263
        %v274 = vmul.f32 %v273, 1.442695
        %v275 = vpow.pop %v274
        %v276 = vadd.f32 %v266, %v269
        %v277 = vadd.f32 %v276, %v272
        %v278 = vadd.f32 %v277, %v275
        %v279 = vrcp.pop %v278
        %v280 = vmul.f32 %v278, %v279
        %v281 = vsub.f32 2.0, %v280
        %v282 = vmul.f32 %v279, %v281
        %v283 = vmul.f32 %v266, %v282
        %vm284 = vcmp.eq.s32.totalorder %v250, 0
        %v285 = vsel %vm284, 1, 0
        %v286 = vcvt.s32.f32 %v285
        %v287 = vld [vmem:[%s231] sm:$0xff]
        %v288 = vmul.f32 %v283, %v286
        %v289 = vadd.f32 %v287, %v288
        %290 = vst [vmem:[%s231] sm:$0xff] %v289
        %s291 = scalar_lea.vmem %s231, 32 [#allocation7]
        %v292 = vld [vmem:[%s291] sm:$0xff]
        %v293 = vmul.f32 %v283, %v253
        %v294 = vadd.f32 %v292, %v293
        %295 = vst [vmem:[%s291] sm:$0xff] %v294
        %s296 = scalar_lea.vmem %s231, 64 [#allocation7]
        %v297 = vld [vmem:[%s296] sm:$0xff]
        %v298 = vadd.f32 %v297, %v286
        %299 = vst [vmem:[%s296] sm:$0xff] %v298
        %v300 = vmul.f32 %v269, %v282
        %vm301 = vcmp.eq.s32.totalorder %v250, 1
        %v302 = vsel %vm301, 1, 0
        %v303 = vcvt.s32.f32 %v302
        %s304 = scalar_lea.vmem %s231, 8 [#allocation7]
        %v305 = vld [vmem:[%s304] sm:$0xff]
        %v306 = vmul.f32 %v300, %v303
        %v307 = vadd.f32 %v305, %v306
        %308 = vst [vmem:[%s304] sm:$0xff] %v307
        %s309 = scalar_lea.vmem %s231, 40 [#allocation7]
        %v310 = vld [vmem:[%s309] sm:$0xff]
        %v311 = vmul.f32 %v300, %v253
        %v312 = vadd.f32 %v310, %v311
        %313 = vst [vmem:[%s309] sm:$0xff] %v312
        %s314 = scalar_lea.vmem %s231, 72 [#allocation7]
        %v315 = vld [vmem:[%s314] sm:$0xff]
        %v316 = vadd.f32 %v315, %v303
        %317 = vst [vmem:[%s314] sm:$0xff] %v316
        %v318 = vmul.f32 %v272, %v282
        %vm319 = vcmp.eq.s32.totalorder %v250, 2
        %v320 = vsel %vm319, 1, 0
        %v321 = vcvt.s32.f32 %v320
        %s322 = scalar_lea.vmem %s231, 16 [#allocation7]
        %v323 = vld [vmem:[%s322] sm:$0xff]
        %v324 = vmul.f32 %v318, %v321
        %v325 = vadd.f32 %v323, %v324
        %326 = vst [vmem:[%s322] sm:$0xff] %v325
        %s327 = scalar_lea.vmem %s231, 48 [#allocation7]
        %v328 = vld [vmem:[%s327] sm:$0xff]
        %v329 = vmul.f32 %v318, %v253
        %v330 = vadd.f32 %v328, %v329
        %331 = vst [vmem:[%s327] sm:$0xff] %v330
        %s332 = scalar_lea.vmem %s231, 80 [#allocation7]
        %v333 = vld [vmem:[%s332] sm:$0xff]
        %v334 = vadd.f32 %v333, %v321
        %335 = vst [vmem:[%s332] sm:$0xff] %v334
        %v336 = vmul.f32 %v275, %v282
        %vm337 = vcmp.eq.s32.totalorder %v250, 3
        %v338 = vsel %vm337, 1, 0
        %v339 = vcvt.s32.f32 %v338
        %s340 = scalar_lea.vmem %s231, 24 [#allocation7]
        %v341 = vld [vmem:[%s340] sm:$0xff]
        %v342 = vmul.f32 %v336, %v339
        %v343 = vadd.f32 %v341, %v342
        %344 = vst [vmem:[%s340] sm:$0xff] %v343
        %s345 = scalar_lea.vmem %s231, 56 [#allocation7]
        %v346 = vld [vmem:[%s345] sm:$0xff]
        %v347 = vmul.f32 %v336, %v253
        %v348 = vadd.f32 %v346, %v347
        %349 = vst [vmem:[%s345] sm:$0xff] %v348
        %s350 = scalar_lea.vmem %s231, 88 [#allocation7]
        %v351 = vld [vmem:[%s350] sm:$0xff]
        %v352 = vadd.f32 %v351, %v339
        %353 = vst [vmem:[%s350] sm:$0xff] %v352
        %s354 = sand.u32 %s111, 1
        %s355 = scalar_lea.sflag [#allocation4], %s354
        %s356 = sand.u32 %s111, 1
        %s357 = smul.addr %s356, 96
        %s358 = scalar_lea.vmem [#allocation7], %s357
        // Predicated region
        $region41: #{tpu_custom_call.1} parent=27 // pred_check
          %p359 = pneg %p121
        $region42: #{tpu_custom_call.1} parent=27 // pred_check_branch
          %361 = sbr.rel (%p359) target = $region44
        $region43: #{tpu_custom_call.1} parent=27 // pred_region
          %s363 = ssub.s32 1536, 1536
          %364 = vsyncadd %s355, %s363
          %s365 = smul.addr %s28, 12
          %s366 = smul.addr %s27, 12
          %s367 = sadd.s32 %s365, %s366
          %s368 = smul.addr %s367, 128
          %s369 = scalar_lea.hbm %s2, %s368
          %s370 = sshll.u32 %s358, 4
          %s371 = int_to_ptr.vmem [resolvable:$true] %s370
          %376 = dma.vmem_to_hbm [thread:$0]  %s371, 1536, %s369, %s355, 128, 128, 8
        $region44: #{tpu_custom_call.1} parent=27 // pred_fallthru
          _
      $region28: #{tpu_custom_call.1} parent=5 // pred_fallthru
        _
      %p377 = scmp.le.s32.totalorder 2, %s17
      // Predicated region
      $region45: #{tpu_custom_call.1} parent=5 // pred_check
        %p378 = pneg %p377
      $region46: #{tpu_custom_call.1} parent=5 // pred_check_branch
        %380 = sbr.rel (%p378) target = $region48
      $region47: #{tpu_custom_call.1} parent=5 // pred_region
        %s381 = ssub.s32 %s17, 2
        // Predicated region
        $region49: #{tpu_custom_call.1} parent=47 // pred_check
          %p382 = pneg %p127
        $region50: #{tpu_custom_call.1} parent=47 // pred_check_branch
          %384 = sbr.rel (%p382) target = $region52
        $region51: #{tpu_custom_call.1} parent=47 // pred_region
          %s385 = sand.u32 %s112, 1
          %s386 = scalar_lea.sflag [#allocation4], %s385
          %s387 = sand.u32 %s112, 1
          %s388 = smul.addr %s387, 96
          %s389 = scalar_lea.vmem [#allocation7], %s388
          %390 = dma.done %s386, 1536
        $region52: #{tpu_custom_call.1} parent=47 // pred_fallthru
          _
      $region48: #{tpu_custom_call.1} parent=5 // pred_fallthru
        _
    $region6: #{tpu_custom_call.1} parent=1 // loop_footer
      %s21 = sadd.s32 1, %s17
    $region7: #{tpu_custom_call.1} parent=1 // loop_footer_branch
      %16 = sbr.rel target = $region3
    $region8: #{tpu_custom_call.1} parent=1 // loop_exit
      _
    %391 = vsyncpa [#allocation3], 1
    %s392 = scalar_lea.sflag [#allocation3], 1
    %393 = vsyncpa %s392, 1
    %394 = vsyncpa [#allocation6], 1
    %s395 = scalar_lea.sflag [#allocation6], 1
    %396 = vsyncpa %s395, 1
    %397 = vsyncpa [#allocation4], 1
    %s398 = scalar_lea.sflag [#allocation4], 1
    %399 = vsyncpa %s398, 1

</llo_original>
